<compile_context>
chip_gen: v7x
topology: tpu7x:2x2x1
jax: 0.10.0
libtpu: 0.0.40
codegen_flags: <defaults>
</compile_context>

<pallas_src>
import functools

import numpy as np
import jax
import jax.numpy as jnp
from jax.experimental import pallas as pl
from jax.experimental.pallas import tpu as pltpu


# MXU-native operand dtype (accumulation is always f32 via preferred_element_type).
# TODO(synk): for full DMA savings also store weights/activations as bf16 in HBM.
MATMUL_DTYPE = jnp.bfloat16

# Conservative scoped-VMEM limit that is safe on v5e/v6e (128 MiB physical) and
# v7x (64 MiB physical).  Raise to ~100 MiB on v5e/v6e for bigger tiles.
_VMEM_LIMIT_BYTES = 48 * 1024 * 1024


# ----------------------------------------------------------------------------
# Kernel 1: row+column tiled linear projection  y = x @ W + b
# ----------------------------------------------------------------------------
def _linear_kernel(x_ref, w_ref, b_ref, o_ref):
    x = x_ref[...].astype(MATMUL_DTYPE)
    w = w_ref[...].astype(MATMUL_DTYPE)
    o_ref[...] = (
        jnp.dot(x, w, preferred_element_type=jnp.float32) + b_ref[...]
    ).astype(o_ref.dtype)


def linear(x2d, w, b, *, tile_m=512, tile_n=512):
    """x2d: (M, K), w: (K, N), b: (N,) -> (M, N), tiled over M and N."""
    M, K = x2d.shape
    N = w.shape[1]
    tm = min(tile_m, M)                       # rows per step
    tn = N if N <= tile_n else tile_n         # weight-column tile (128-multiple)
    return pl.pallas_call(
        _linear_kernel,
        out_shape=jax.ShapeDtypeStruct((M, N), jnp.float32),
        grid=(pl.cdiv(M, tm), pl.cdiv(N, tn)),
        in_specs=[
            pl.BlockSpec((tm, K), lambda i, j: (i, 0)),
            pl.BlockSpec((K, tn), lambda i, j: (0, j)),
            pl.BlockSpec((1, tn), lambda i, j: (0, j)),
        ],
        out_specs=pl.BlockSpec((tm, tn), lambda i, j: (i, j)),
        compiler_params=pltpu.CompilerParams(
            dimension_semantics=("parallel", "parallel"),
            vmem_limit_bytes=_VMEM_LIMIT_BYTES),
    )(x2d, w, b.reshape(1, N))


# ----------------------------------------------------------------------------
# Kernel 2: scaled dot-product attention.
#   grid = (batch, Lq-tile); all heads handled inside the kernel.
#   q/k/v stay in the (L, H*d) layout -> no head-transpose HBM round trips,
#   one lane-dense context store per step.
# ----------------------------------------------------------------------------
def _attention_kernel(q_ref, k_ref, v_ref, bias_ref, out_ref, *attn_refs,
                      n_head, d_k, d_v, inv_temperature):
    attn_ref = attn_refs[0] if attn_refs else None

    # Load the full lane-dense tiles once; scale q by 1/temperature once.
    q = (q_ref[0].astype(jnp.float32) * inv_temperature).astype(MATMUL_DTYPE)  # (tq, H*d_k)
    k = k_ref[0].astype(MATMUL_DTYPE)                                          # (Lk, H*d_k)
    v = v_ref[0].astype(MATMUL_DTYPE)                                          # (Lk, H*d_v)
    bias = bias_ref[0]                                   # (1 or tq, Lk), 0 / -1e30, f32

    ctxs = []
    for h in range(n_head):                              # static unroll over heads
        qh = q[:, h * d_k:(h + 1) * d_k]                 # in-register slices
        kh = k[:, h * d_k:(h + 1) * d_k]
        vh = v[:, h * d_v:(h + 1) * d_v]

        # scores: contract last dims (no explicit transpose op)
        s = jax.lax.dot_general(qh, kh, (((1,), (1,)), ((), ())),
                                preferred_element_type=jnp.float32)   # (tq, Lk)
        s = s + bias

        s_max = jnp.max(s, axis=-1, keepdims=True)
        p = jnp.exp(s - s_max)
        denom = jnp.sum(p, axis=-1, keepdims=True)
        p = p * pl.reciprocal(denom, approx=True)        # softmax over keys
        # TODO(synk): attention dropout omitted (inference-mode identity)

        if attn_ref is not None:
            attn_ref[h, 0] = p                            # lane-dense (tq, Lk) store

        ctxs.append(jnp.dot(p.astype(MATMUL_DTYPE), vh,
                            preferred_element_type=jnp.float32))      # (tq, d_v)

    # single lane-dense (tq, H*d_v) store in the layout the fc expects
    out_ref[0] = jnp.concatenate(ctxs, axis=-1).astype(out_ref.dtype)
    # TODO(synk): for long sequences, add flash-style Lk tiling (online softmax)
    # to bound VMEM independent of key length.


def scaled_dot_product_attention(qh, kh, vh, bias, *, n_head, d_k, d_v,
                                 temperature, return_attn=True, tile_q=256):
    """qh: (B, Lq, H*d_k), kh: (B, Lk, H*d_k), vh: (B, Lk, H*d_v),
       bias: (B, 1 or Lq, Lk) additive mask (0 keep / -1e30 masked)."""
    B, Lq, _ = qh.shape
    Lk = kh.shape[1]
    lq_bias = bias.shape[1]
    tq = min(tile_q, Lq)

    kernel = functools.partial(
        _attention_kernel, n_head=n_head, d_k=d_k, d_v=d_v,
        inv_temperature=float(1.0 / temperature))

    if lq_bias == 1:
        bias_spec = pl.BlockSpec((1, 1, Lk), lambda b, qi: (b, 0, 0))
    else:
        bias_spec = pl.BlockSpec((1, tq, Lk), lambda b, qi: (b, qi, 0))

    in_specs = [
        pl.BlockSpec((1, tq, n_head * d_k), lambda b, qi: (b, qi, 0)),
        pl.BlockSpec((1, Lk, n_head * d_k), lambda b, qi: (b, 0, 0)),
        pl.BlockSpec((1, Lk, n_head * d_v), lambda b, qi: (b, 0, 0)),
        bias_spec,                                        # one bias copy, all heads
    ]
    out_sds = jax.ShapeDtypeStruct((B, Lq, n_head * d_v), jnp.float32)
    out_spec = pl.BlockSpec((1, tq, n_head * d_v), lambda b, qi: (b, qi, 0))
    if return_attn:
        out_shape = (out_sds,
                     jax.ShapeDtypeStruct((n_head, B, Lq, Lk), jnp.float32))
        out_specs = (out_spec,
                     pl.BlockSpec((n_head, 1, tq, Lk), lambda b, qi: (0, b, qi, 0)))
    else:
        out_shape = out_sds
        out_specs = out_spec

    return pl.pallas_call(
        kernel,
        out_shape=out_shape,
        grid=(B, pl.cdiv(Lq, tq)),
        in_specs=in_specs,
        out_specs=out_specs,
        compiler_params=pltpu.CompilerParams(
            dimension_semantics=("parallel", "parallel"),
            vmem_limit_bytes=_VMEM_LIMIT_BYTES),
    )(qh, kh, vh, bias)


# ----------------------------------------------------------------------------
# Kernel 3: fc projection + residual + LayerNorm (fused epilogue), tiled over M
# ----------------------------------------------------------------------------
def _fc_res_ln_kernel(x_ref, w_ref, b_ref, res_ref, g_ref, beta_ref, o_ref, *, eps):
    x = x_ref[...].astype(MATMUL_DTYPE)
    w = w_ref[...].astype(MATMUL_DTYPE)
    y = jnp.dot(x, w, preferred_element_type=jnp.float32) + b_ref[...]
    # TODO(synk): output dropout omitted (inference-mode identity)
    y = y + res_ref[...]
    mean = jnp.mean(y, axis=-1, keepdims=True)
    var = jnp.mean(jnp.square(y - mean), axis=-1, keepdims=True)
    yn = (y - mean) * jax.lax.rsqrt(var + eps)
    o_ref[...] = (yn * g_ref[...] + beta_ref[...]).astype(o_ref.dtype)


def fc_residual_layernorm(x2d, w, b, res2d, gamma, beta, *, eps=1e-5, tile_m=512):
    """x2d: (M, n_head*d_v), w: (n_head*d_v, d_model), res2d: (M, d_model).
    Full d_model kept per row tile (LayerNorm needs the whole feature row)."""
    M, K = x2d.shape
    N = w.shape[1]
    tm = min(tile_m, M)
    return pl.pallas_call(
        functools.partial(_fc_res_ln_kernel, eps=eps),
        out_shape=jax.ShapeDtypeStruct((M, N), jnp.float32),
        grid=(pl.cdiv(M, tm),),
        in_specs=[
            pl.BlockSpec((tm, K), lambda i: (i, 0)),
            pl.BlockSpec((K, N), lambda i: (0, 0)),
            pl.BlockSpec((1, N), lambda i: (0, 0)),
            pl.BlockSpec((tm, N), lambda i: (i, 0)),
            pl.BlockSpec((1, N), lambda i: (0, 0)),
            pl.BlockSpec((1, N), lambda i: (0, 0)),
        ],
        out_specs=pl.BlockSpec((tm, N), lambda i: (i, 0)),
        compiler_params=pltpu.CompilerParams(
            dimension_semantics=("parallel",),
            vmem_limit_bytes=_VMEM_LIMIT_BYTES),
    )(x2d, w, b.reshape(1, N), res2d, gamma.reshape(1, N), beta.reshape(1, N))


# ----------------------------------------------------------------------------
# Parameter init (deterministic, mirrors the PyTorch __init__ shapes)
# ----------------------------------------------------------------------------
def init_params(key, n_head, d_model, d_k, d_v):
    keys = jax.random.split(key, 8)
    std_qk = np.sqrt(2.0 / (d_model + d_k))
    std_v = np.sqrt(2.0 / (d_model + d_v))
    # weights stored as (in_features, out_features) so the kernel does x @ W
    w_qs = jax.random.normal(keys[0], (d_model, n_head * d_k), jnp.float32) * std_qk
    w_ks = jax.random.normal(keys[1], (d_model, n_head * d_k), jnp.float32) * std_qk
    w_vs = jax.random.normal(keys[2], (d_model, n_head * d_v), jnp.float32) * std_v
    b_qs = jax.random.normal(keys[3], (n_head * d_k,), jnp.float32) * 0.01
    b_ks = jax.random.normal(keys[4], (n_head * d_k,), jnp.float32) * 0.01
    b_vs = jax.random.normal(keys[5], (n_head * d_v,), jnp.float32) * 0.01
    # xavier_normal for fc: std = sqrt(2 / (fan_in + fan_out))
    std_fc = np.sqrt(2.0 / (n_head * d_v + d_model))
    w_fc = jax.random.normal(keys[6], (n_head * d_v, d_model), jnp.float32) * std_fc
    b_fc = jax.random.normal(keys[7], (d_model,), jnp.float32) * 0.01
    gamma = jnp.ones((d_model,), jnp.float32)
    beta = jnp.zeros((d_model,), jnp.float32)
    # Precomputed fused QKV weights for the self-attention fast path (no
    # per-forward device-side concatenate).
    w_qkv = jnp.concatenate([w_qs, w_ks, w_vs], axis=1)
    b_qkv = jnp.concatenate([b_qs, b_ks, b_vs], axis=0)
    return dict(w_qs=w_qs, w_ks=w_ks, w_vs=w_vs,
                b_qs=b_qs, b_ks=b_ks, b_vs=b_vs,
                w_qkv=w_qkv, b_qkv=b_qkv,
                w_fc=w_fc, b_fc=b_fc, gamma=gamma, beta=beta)


# ----------------------------------------------------------------------------
# Forward pass wrapper (glue reshapes in plain JAX, compute in Pallas)
# ----------------------------------------------------------------------------
def multi_head_attention(params, q, k, v, mask=None, *, n_head, d_k, d_v,
                         return_attn=True):
    sz_b, len_q, d_model = q.shape
    _, len_k, _ = k.shape
    residual = q

    # ---- projections -------------------------------------------------------
    if (q is k) and (k is v):
        # self-attention fast path: one fused QKV matmul (activation read once)
        qkv = linear(q.reshape(-1, d_model), params["w_qkv"], params["b_qkv"])
        nd_k = n_head * d_k
        qp = qkv[:, :nd_k]
        kp = qkv[:, nd_k:2 * nd_k]
        vp = qkv[:, 2 * nd_k:]
    else:
        qp = linear(q.reshape(-1, d_model), params["w_qs"], params["b_qs"])
        kp = linear(k.reshape(-1, d_model), params["w_ks"], params["b_ks"])
        vp = linear(v.reshape(-1, d_model), params["w_vs"], params["b_vs"])

    # keep the (B, L, H*d) layout; heads are sliced inside the attention kernel
    qh = qp.reshape(sz_b, len_q, n_head * d_k)
    kh = kp.reshape(sz_b, len_k, n_head * d_k)
    vh = vp.reshape(sz_b, len_k, n_head * d_v)

    # Additive mask bias (0 keep / -1e30 masked).  Key-padding masks (query dim
    # broadcastable) stay compact: (B, 1, Lk) instead of a full (B, Lq, Lk) f32
    # tensor in HBM.  One copy is reused for every head.
    # TODO(synk): causal masks could be built in-kernel from broadcasted_iota.
    if mask is None:
        bias = jnp.zeros((sz_b, 1, len_k), jnp.float32)
    else:
        m = jnp.asarray(mask)
        if m.ndim != 3:
            raise ValueError("mask must be 3-D, broadcastable to (B, Lq, Lk)")
        lq_b = 1 if m.shape[1] == 1 else len_q
        m = jnp.broadcast_to(m, (sz_b, lq_b, len_k))
        bias = jnp.where(m, jnp.float32(-1e30), jnp.float32(0.0))

    temperature = float(np.power(d_k, 0.5))
    att = scaled_dot_product_attention(
        qh, kh, vh, bias, n_head=n_head, d_k=d_k, d_v=d_v,
        temperature=temperature, return_attn=return_attn)
    if return_attn:
        out_bl, attn_hb = att
        # (H, B, Lq, Lk) -> (H*B, Lq, Lk): free view, matches torch's head-major order
        attn = attn_hb.reshape(n_head * sz_b, len_q, len_k)
    else:
        out_bl, attn = att, None

    # ---- fc + residual + LayerNorm (fused) ----------------------------------
    final = fc_residual_layernorm(
        out_bl.reshape(-1, n_head * d_v),
        params["w_fc"], params["b_fc"],
        residual.reshape(-1, d_model),
        params["gamma"], params["beta"],
    ).reshape(sz_b, len_q, d_model)

    return final, attn


# ----------------------------------------------------------------------------
if __name__ == "__main__":
    n_head, d_model, d_k, d_v = 4, 32, 8, 8
    sz_b, seq_len = 2, 8

    root = jax.random.PRNGKey(0)
    k_param, k_q, k_k, k_v = jax.random.split(root, 4)

    params = init_params(k_param, n_head, d_model, d_k, d_v)

    q = jax.random.normal(k_q, (sz_b, seq_len, d_model), jnp.float32)
    k = jax.random.normal(k_k, (sz_b, seq_len, d_model), jnp.float32)
    v = jax.random.normal(k_v, (sz_b, seq_len, d_model), jnp.float32)

    # padding-style mask: last 2 key positions are masked (True == masked)
    mask = jnp.zeros((sz_b, seq_len, seq_len), dtype=bool).at[:, :, -2:].set(True)

    # cross-attention path (separate Q/K/V projections, full (B,Lq,Lk) mask)
    out, attn = multi_head_attention(params, q, k, v, mask,
                                     n_head=n_head, d_k=d_k, d_v=d_v)
    jax.block_until_ready((out, attn))

    assert out.shape == (sz_b, seq_len, d_model)
    assert attn.shape == (n_head * sz_b, seq_len, seq_len)
    assert bool(jnp.all(jnp.isfinite(out)))
    # masked key columns must get ~zero attention probability
    assert float(jnp.max(attn[:, :, -2:])) < 1e-6
    # softmax rows sum to ~1 (approx reciprocal tolerance)
    assert bool(jnp.allclose(attn.sum(-1), 1.0, atol=5e-3))

    # self-attention fast path (fused QKV) with a compact (B, 1, Lk) mask
    mask_kp = mask[:, :1, :]
    out2, attn2 = multi_head_attention(params, q, q, q, mask_kp,
                                       n_head=n_head, d_k=d_k, d_v=d_v)
    jax.block_until_ready((out2, attn2))
    assert out2.shape == (sz_b, seq_len, d_model)
    assert attn2.shape == (n_head * sz_b, seq_len, seq_len)
    assert float(jnp.max(attn2[:, :, -2:])) < 1e-6

    print("KERNEL_OK")
</pallas_src>

<mosaic_0001>
module attributes {stable_mosaic.version = 11 : i64} {
  func.func @_linear_kernel(%arg0: i32, %arg1: i32, %arg2: memref<16x32xf32, #tpu.memory_space<vmem>>, %arg3: memref<32x32xf32, #tpu.memory_space<vmem>>, %arg4: memref<1x32xf32, #tpu.memory_space<vmem>>, %arg5: memref<16x32xf32, #tpu.memory_space<vmem>>) attributes {dimension_semantics = [#tpu.dimension_semantics<parallel>, #tpu.dimension_semantics<parallel>], iteration_bounds = array<i64: 1, 1>, scalar_prefetch = 0 : i64, scratch_operands = 0 : i64, tpu.core_type = #tpu.core_type<tc>, window_params = [{transform_indices = @transform_0, window_bounds = array<i64: 16, 32>}, {transform_indices = @transform_1, window_bounds = array<i64: 32, 32>}, {transform_indices = @transform_2, window_bounds = array<i64: 1, 32>}, {transform_indices = @transform_3, window_bounds = array<i64: 16, 32>}]} {
    %c0 = arith.constant 0 : index
    %c0_0 = arith.constant 0 : index
    %0 = vector.load %arg2[%c0, %c0_0] : memref<16x32xf32, #tpu.memory_space<vmem>>, vector<16x32xf32>
    %1 = arith.truncf %0 : vector<16x32xf32> to vector<16x32xbf16>
    %c0_1 = arith.constant 0 : index
    %c0_2 = arith.constant 0 : index
    %2 = vector.load %arg3[%c0_1, %c0_2] : memref<32x32xf32, #tpu.memory_space<vmem>>, vector<32x32xf32>
    %3 = arith.truncf %2 : vector<32x32xf32> to vector<32x32xbf16>
    %cst = arith.constant dense<0.000000e+00> : vector<16x32xf32>
    %4 = tpu.matmul %1, %3, %cst {dimension_numbers = #tpu.dot_dimension_numbers<[1], [0], [0], [1], [0, 0, 1, 1], [], []>} : vector<16x32xbf16>, vector<32x32xbf16>, vector<16x32xf32> -> vector<16x32xf32>
    %c0_3 = arith.constant 0 : index
    %c0_4 = arith.constant 0 : index
    %5 = vector.load %arg4[%c0_3, %c0_4] : memref<1x32xf32, #tpu.memory_space<vmem>>, vector<1x32xf32>
    %6 = vector.broadcast %5 : vector<1x32xf32> to vector<16x32xf32>
    %7 = arith.addf %4, %6 : vector<16x32xf32>
    %c0_5 = arith.constant 0 : index
    %c0_6 = arith.constant 0 : index
    %8 = vector.load %arg5[%c0_5, %c0_6] : memref<16x32xf32, #tpu.memory_space<vmem>>, vector<16x32xf32>
    tpu.vector_store %arg5[%c0_5, %c0_6], %7 {strides = array<i32>} : memref<16x32xf32, #tpu.memory_space<vmem>>, vector<16x32xf32>,
    return
  }
  func.func @transform_0(%arg0: i32, %arg1: i32) -> (i32, i32) {
    %c0_i32 = arith.constant 0 : i32
    %c0_i32_0 = arith.constant 0 : i32
    return %arg0, %c0_i32 : i32, i32
  }
  func.func @transform_1(%arg0: i32, %arg1: i32) -> (i32, i32) {
    %c0_i32 = arith.constant 0 : i32
    %c0_i32_0 = arith.constant 0 : i32
    return %c0_i32, %arg1 : i32, i32
  }
  func.func @transform_2(%arg0: i32, %arg1: i32) -> (i32, i32) {
    %c0_i32 = arith.constant 0 : i32
    %c0_i32_0 = arith.constant 0 : i32
    return %c0_i32, %arg1 : i32, i32
  }
  func.func @transform_3(%arg0: i32, %arg1: i32) -> (i32, i32) {
    %c0_i32 = arith.constant 0 : i32
    return %arg0, %arg1 : i32, i32
  }
}

</mosaic_0001>

<llo_original>
// kernel: tpu_custom_call.1
$region0: #{tpu_custom_call.1}
  #allocation0 [shape = 'u32[]', space=smem, size = 0x4, offset = 0x4, fixed_abs, tag = 'smem constant byte address 0x4 - core index']
  #allocation1 [shape = 'u32[144,128]{1,0:T(1,128)}', space=vmem, size = 0x12000, scoped, tag = 'internal scratch']
  %s0 = inlined_call_operand.hbm [shape: f32[16,32], index: 0, kind: input, shape index: {}]
  %s1 = inlined_call_operand.hbm [shape: f32[32,32], index: 1, kind: input, shape index: {}]
  %s2 = inlined_call_operand.vmem [shape: f32[1,32], index: 2, kind: input, shape index: {}]
  %s3 = inlined_call_operand.hbm [shape: f32[16,32], index: 3, kind: output, shape index: {}]
  %s4 = sld [smem:[#allocation0]]
  $region30: #{tpu_custom_call.1} parent=0
    _
  %s6 = ssub.s32 1, %s4
  %s7 = scalar_select 0, %s6, %s4
  $region1: #{tpu_custom_call.1} parent=0
    #allocation2 [shape = 'u8[8192]{0}', space=vmem, size = 0x2000, scoped, tag = 'input window, operand 0, single buffered']
    #allocation3 [shape = 's32[1]{0}', space=sflag, size = 0x4, scoped, tag = 'scoped memory for tpu_custom_call.1']
    #allocation4 [shape = 's32[1]{0}', space=sflag, size = 0x4, scoped, tag = 'scoped memory for tpu_custom_call.1']
    #allocation5 [shape = 'u8[16384]{0}', space=vmem, size = 0x4000, scoped, tag = 'input window, operand 1, single buffered']
    #allocation6 [shape = 's32[1]{0}', space=sflag, size = 0x4, scoped, tag = 'scoped memory for tpu_custom_call.1']
    #allocation7 [shape = 'u8[8192]{0}', space=vmem, size = 0x2000, scoped, tag = 'output window, operand 0, single buffered']
    %8 = vsyncpa [#allocation3], 0
    %9 = vsyncpa [#allocation6], 0
    %10 = vsyncpa [#allocation4], 0
    // Predicated region
    $region2: #{tpu_custom_call.1} parent=1 // pred_check
      _
    $region3: #{tpu_custom_call.1} parent=1 // pred_check_branch
      %12 = sbr.rel (0) target = $region5
    $region4: #{tpu_custom_call.1} parent=1 // pred_region
      %s14 = ssub.s32 256, 256
      %15 = vsyncadd [#allocation3], %s14
      %s16 = sshll.u32 [#allocation2], 4
      %s17 = int_to_ptr.vmem [resolvable:$true] %s16
      %22 = dma.hbm_to_vmem [thread:$0]  %s0, 256, %s17, [#allocation3], 128, 128, 8
    $region5: #{tpu_custom_call.1} parent=1 // pred_fallthru
      _
    // Predicated region
    $region6: #{tpu_custom_call.1} parent=1 // pred_check
      _
    $region7: #{tpu_custom_call.1} parent=1 // pred_check_branch
      %24 = sbr.rel (0) target = $region9
    $region8: #{tpu_custom_call.1} parent=1 // pred_region
      %s26 = ssub.s32 512, 512
      %27 = vsyncadd [#allocation6], %s26
      %s28 = sshll.u32 [#allocation5], 4
      %s29 = int_to_ptr.vmem [resolvable:$true] %s28
      %34 = dma.hbm_to_vmem [thread:$0]  %s1, 512, %s29, [#allocation6], 128, 128, 8
    $region9: #{tpu_custom_call.1} parent=1 // pred_fallthru
      _
    // Predicated region
    $region10: #{tpu_custom_call.1} parent=1 // pred_check
      _
    $region11: #{tpu_custom_call.1} parent=1 // pred_check_branch
      %36 = sbr.rel (0) target = $region13
    $region12: #{tpu_custom_call.1} parent=1 // pred_region
      _
    $region13: #{tpu_custom_call.1} parent=1 // pred_fallthru
      _
    // Predicated region
    $region14: #{tpu_custom_call.1} parent=1 // pred_check
      _
    $region15: #{tpu_custom_call.1} parent=1 // pred_check_branch
      %38 = sbr.rel (0) target = $region17
    $region16: #{tpu_custom_call.1} parent=1 // pred_region
      %39 = dma.done [#allocation3], 256
    $region17: #{tpu_custom_call.1} parent=1 // pred_fallthru
      _
    // Predicated region
    $region18: #{tpu_custom_call.1} parent=1 // pred_check
      _
    $region19: #{tpu_custom_call.1} parent=1 // pred_check_branch
      %41 = sbr.rel (0) target = $region21
    $region20: #{tpu_custom_call.1} parent=1 // pred_region
      %42 = dma.done [#allocation6], 512
    $region21: #{tpu_custom_call.1} parent=1 // pred_fallthru
      _
    %v44 = vld [vmem:[#allocation2] sm:$0xff]
    %v45 = vld [vmem:[#allocation2 + $0x8] sm:$0xff]
    %v46 = vpack.c.bf16 %v45, %v44
    %v47 = vld [vmem:[#allocation5] sm:$0xff]
    %v48 = vld [vmem:[#allocation5 + $0x8] sm:$0xff]
    %v49 = vld [vmem:[#allocation5 + $0x10] sm:$0xff]
    %v50 = vld [vmem:[#allocation5 + $0x18] sm:$0xff]
    %v51 = vpack.c.bf16 %v48, %v47
    %v52 = vpack.c.bf16 %v50, %v49
    %v53 = vld [vmem:[%s2] sm:$0x1]
    %v55 = vlaneseq
    %v56 = vshrl.u32 %v55, 7
    %v57 = vsub.s32 0, %v56
    %v58 = vrot.slane %v53, %v57
    %vm60 = vcmask 261120
    %v62 = vsel %vm60, %v46, 0
    %64 = vmatprep.subr.bf16.mxu0 0
    %65 = vmatpush1.bf16.msra.mxu0 %v51
    %66 = vmatprep.subr.bf16.mxu0 0
    %67 = vmatpush1.bf16.msra.mxu0 %v52
    %68 = vmatprep.subr.bf16.mxu0 0
    %69 = vmatpush1.bf16.msra.mxu0 0
    %70 = vmatprep.subr.bf16.mxu0 0
    %71 = vmatpush1.bf16.msra.mxu0 0
    %72 = vmatprep.subr.bf16.mxu0 0
    %73 = vmatpush1.bf16.msra.mxu0 0
    %74 = vmatprep.subr.bf16.mxu0 0
    %75 = vmatpush1.bf16.msra.mxu0 0
    %76 = vmatprep.subr.bf16.mxu0 0
    %77 = vmatpush1.bf16.msra.mxu0 0
    %78 = vmatprep.subr.bf16.mxu0 0
    %79 = vmatpush1.bf16.msra.mxu0 0
    %80 = vmatprep.subr.bf16.mxu0 0
    %81 = vmatpush1.bf16.msra.mxu0 0
    %82 = vmatprep.subr.bf16.mxu0 0
    %83 = vmatpush1.bf16.msra.mxu0 0
    %84 = vmatprep.subr.bf16.mxu0 0
    %85 = vmatpush1.bf16.msra.mxu0 0
    %86 = vmatprep.subr.bf16.mxu0 0
    %87 = vmatpush1.bf16.msra.mxu0 0
    %88 = vmatprep.subr.bf16.mxu0 0
    %89 = vmatpush1.bf16.msra.mxu0 0
    %90 = vmatprep.subr.bf16.mxu0 0
    %91 = vmatpush1.bf16.msra.mxu0 0
    %92 = vmatprep.subr.bf16.mxu0 0
    %93 = vmatpush1.bf16.msra.mxu0 0
    %94 = vmatprep.subr.bf16.mxu0 0
    %95 = vmatpush1.bf16.msra.mxu0 0
    %96 = vmatprep.mubr.bf16.mxu0 0
    %97 = vmatmul.mubr.bf16.gmra.mrb[0].mxu0 %v62
    %v98 = vpop.f32.mrb[0].mxu0
    %v99 = vadd.f32 %v58, %v98
    %v100 = vpop.f32.mrb[0].mxu0
    %v101 = vpop.f32.mrb[0].mxu0
    %v102 = vadd.f32 %v58, %v101
    %v103 = vpop.f32.mrb[0].mxu0
    %104 = vdwg.mxu0
    %105 = vst.msk [vmem:[#allocation7] sm:$0xff] %vm60, %v99
    %106 = vst.msk [vmem:[#allocation7 + $0x8] sm:$0xff] %vm60, %v102
    // Predicated region
    $region22: #{tpu_custom_call.1} parent=1 // pred_check
      _
    $region23: #{tpu_custom_call.1} parent=1 // pred_check_branch
      %108 = sbr.rel (0) target = $region25
    $region24: #{tpu_custom_call.1} parent=1 // pred_region
      %s110 = ssub.s32 256, 256
      %111 = vsyncadd [#allocation4], %s110
      %s112 = sshll.u32 [#allocation7], 4
      %s113 = int_to_ptr.vmem [resolvable:$true] %s112
      %118 = dma.vmem_to_hbm [thread:$0]  %s113, 256, %s3, [#allocation4], 128, 128, 8
    $region25: #{tpu_custom_call.1} parent=1 // pred_fallthru
      _
    // Predicated region
    $region26: #{tpu_custom_call.1} parent=1 // pred_check
      _
    $region27: #{tpu_custom_call.1} parent=1 // pred_check_branch
      %120 = sbr.rel (0) target = $region29
    $region28: #{tpu_custom_call.1} parent=1 // pred_region
      %121 = dma.done [#allocation4], 256
    $region29: #{tpu_custom_call.1} parent=1 // pred_fallthru
      _
    %122 = vsyncpa [#allocation3], 1
    %123 = vsyncpa [#allocation6], 1
    %124 = vsyncpa [#allocation4], 1

</llo_original>
